<compile_context>
chip_gen: v5e
topology: v5e:2x2
jax: 0.10.0
libtpu: 0.0.40
codegen_flags: <defaults>
</compile_context>

<pallas_src>
import functools

import jax
import jax.numpy as jnp
from jax.experimental import pallas as pl
from jax.experimental.pallas import tpu as pltpu


_MAX_CHUNK_LANES = 1024        # caps block-diagonal weight size and MXU waste factor
_MAX_CHUNK_T = 128
_MAX_BATCH_ELEM_BYTES = 1 << 20  # one batch element (T*F row) must fit a block


def _temporal_attention_kernel(x_ref, w_ref, s_ref, o_ref, *,
                               n_chunks, chunk_t, chunk_lanes):
    """One grid step: a (bb, T*F) slab; row r = batch element, lane t*F+f = x[r,t,f]."""
    w = w_ref[...]        # (chunk_t*F, chunk_t) block-diagonal fc weight (all chunks share it)
    spread = s_ref[...]   # (chunk_t, chunk_t*F) one-hot time -> feature-lane spread

    # ---- logits: one MXU matmul per lane chunk (usually a single chunk).
    e_parts = []
    for c in range(n_chunks):
        xc = x_ref[:, c * chunk_lanes:(c + 1) * chunk_lanes]
        e_parts.append(jnp.dot(xc, w,
                               precision=jax.lax.Precision.HIGHEST,
                               preferred_element_type=jnp.float32))
    e = e_parts[0] if n_chunks == 1 else jnp.concatenate(e_parts, axis=1)  # (bb, T)

    # ---- softmax over time = plain lane reduction on the small logits tensor.
    m = jnp.max(e, axis=1, keepdims=True)
    p = jnp.exp(e - m)
    denom = jnp.sum(p, axis=1, keepdims=True)
    alpha = (p / denom).astype(x_ref.dtype)        # exact divide; tiny tensor

    # ---- rescale: spread alpha across each time step's F lanes (MXU) and do a
    #      single VPU multiply per chunk; x stays in its native dtype throughout.
    for c in range(n_chunks):
        ac = alpha[:, c * chunk_t:(c + 1) * chunk_t]                     # (bb, chunk_t)
        a_full = jnp.dot(ac, spread, preferred_element_type=jnp.float32)  # (bb, chunk_lanes)
        xc = x_ref[:, c * chunk_lanes:(c + 1) * chunk_lanes]
        o_ref[:, c * chunk_lanes:(c + 1) * chunk_lanes] = (
            xc * a_full.astype(xc.dtype)).astype(o_ref.dtype)


def _pick_chunk_t(T, F):
    """Largest divisor of T whose lane chunk keeps the packed weight small."""
    best = 1
    for d in range(1, T + 1):
        if T % d == 0 and d <= _MAX_CHUNK_T and d * F <= _MAX_CHUNK_LANES:
            best = d
    return best


def _pick_batch_block(B, per_batch_bytes, target_bytes):
    """Pick (bb, padded_B): bb divides padded_B, keeps full 8-row sublane tiles
    (or spans all of B), stays under the per-step VMEM target, and prefers
    >= 3-4 evenly split grid steps (pipelining + v7x megacore balance)."""
    cap = max(1, int(target_bytes) // max(int(per_batch_bytes), 1))
    good = [d for d in range(1, B + 1)
            if B % d == 0 and d <= cap and (d % 8 == 0 or d == B)]
    if good:
        def key(d):
            nb = B // d
            return (nb >= 4 and nb % 2 == 0,   # >= 4 steps with an even split
                    nb >= 2 and nb % 2 == 0,   # at least an even 2-way split
                    nb >= 2,                   # at least some pipelining
                    d)                         # then the biggest block
        return max(good, key=key), B
    # Fallback (e.g. a large prime B): pad so an 8-row-aligned block divides it.
    # Padded rows are zeros -> finite self-contained softmax -> sliced off below.
    bb = max(8, (cap // 8) * 8)
    padded = ((B + bb - 1) // bb) * bb
    return bb, padded


def temporal_attention(x, w, b=None, *, target_block_bytes=6 * 1024 * 1024):
    """x: (B, T, F); w: (1, F) = fc.weight; b: (1,) = fc.bias.

    Returns x * softmax_T(x @ w.T + b).  The bias is not needed inside the
    kernel because the softmax over T is shift-invariant.
    """
    del b  # cancels exactly in the softmax
    B, T, F = x.shape
    itemsize = jnp.dtype(x.dtype).itemsize
    if T * F * itemsize > _MAX_BATCH_ELEM_BYTES:
        # TODO(synk): two-pass / online-softmax variant for batch elements whose
        # full (T, F) row does not fit a single VMEM block.
        raise NotImplementedError("temporal_attention: T*F too large for single-block softmax")

    chunk_t = _pick_chunk_t(T, F)
    n_chunks = T // chunk_t
    chunk_lanes = chunk_t * F

    # Lane-dense 2-D view: one batch element per sublane row (contiguous => free).
    x2 = x.reshape(B, T * F)

    # Block-diagonal fc weight and one-hot spread matrix, shared by every lane
    # chunk (the time index is periodic in the flattened layout).  Tiny; resident.
    eye = jnp.eye(chunk_t, dtype=x.dtype)
    w_col = w.reshape(F, 1).astype(x.dtype)
    w_blk = jnp.kron(eye, w_col)                          # (chunk_t*F, chunk_t)
    spread = jnp.kron(eye, jnp.ones((1, F), x.dtype))     # (chunk_t, chunk_t*F)

    per_batch_bytes = T * F * itemsize
    bb, b_pad = _pick_batch_block(B, per_batch_bytes, target_block_bytes)
    if b_pad != B:
        x2 = jnp.pad(x2, ((0, b_pad - B), (0, 0)))
    n_blocks = b_pad // bb

    kernel = functools.partial(_temporal_attention_kernel, n_chunks=n_chunks,
                               chunk_t=chunk_t, chunk_lanes=chunk_lanes)

    out = pl.pallas_call(
        kernel,
        out_shape=jax.ShapeDtypeStruct((b_pad, T * F), x.dtype),
        grid_spec=pltpu.PrefetchScalarGridSpec(
            num_scalar_prefetch=0,
            grid=(n_blocks,),
            in_specs=[
                pl.BlockSpec((bb, T * F), lambda i: (i, 0)),             # x slab
                pl.BlockSpec((chunk_t * F, chunk_t), lambda i: (0, 0)),  # w_blk (resident)
                pl.BlockSpec((chunk_t, chunk_t * F), lambda i: (0, 0)),  # spread (resident)
            ],
            out_specs=pl.BlockSpec((bb, T * F), lambda i: (i, 0)),
        ),
        compiler_params=pltpu.CompilerParams(
            dimension_semantics=("parallel",),
            # 2x(in+out) blocks at <= ~6-8 MiB plus chunk-sized temporaries and
            # the resident weights stays under v7x's 64 MiB physical VMEM while
            # giving v5e/v6e more headroom than their scoped defaults.
            vmem_limit_bytes=48 * 1024 * 1024,
        ),
    )(x2, w_blk, spread)

    if b_pad != B:
        out = out[:B]
    return out.reshape(B, T, F)


def reference(x, w, b):
    e = jnp.einsum("btf,of->bt", x, w) + b[0]        # (B, T)
    alpha = jax.nn.softmax(e, axis=1)
    return x * alpha[..., None]


if __name__ == "__main__":
    B, T, F = 2, 8, 32

    key = jax.random.PRNGKey(0)
    kx, kw, kb = jax.random.split(key, 3)
    x = jax.random.normal(kx, (B, T, F), dtype=jnp.float32)

    # Deterministic parameters mirroring nn.Linear(F, 1) shapes / init range.
    bound = 1.0 / (F ** 0.5)
    w = jax.random.uniform(kw, (1, F), minval=-bound, maxval=bound, dtype=jnp.float32)
    b = jax.random.uniform(kb, (1,), minval=-bound, maxval=bound, dtype=jnp.float32)

    out = temporal_attention(x, w, b)
    out = jax.block_until_ready(out)

    ref = reference(x, w, b)
    assert out.shape == ref.shape
    # Tolerance leaves margin for the MXU's f32 matmul path on the logits.
    assert jnp.allclose(out, ref, atol=2e-3, rtol=2e-3), "mismatch vs reference"

    print("KERNEL_OK")
</pallas_src>

<mosaic_0001>
module attributes {stable_mosaic.version = 11 : i64} {
  func.func @_temporal_attention_kernel(%arg0: i32, %arg1: memref<2x256xf32, #tpu.memory_space<vmem>>, %arg2: memref<256x8xf32, #tpu.memory_space<vmem>>, %arg3: memref<8x256xf32, #tpu.memory_space<vmem>>, %arg4: memref<2x256xf32, #tpu.memory_space<vmem>>) attributes {dimension_semantics = [#tpu.dimension_semantics<parallel>], iteration_bounds = array<i64: 1>, scalar_prefetch = 0 : i64, scratch_operands = 0 : i64, tpu.core_type = #tpu.core_type<tc>, window_params = [{transform_indices = @transform_0, window_bounds = array<i64: 2, 256>}, {pipeline_mode = #tpu.pipeline_mode<synchronous>, transform_indices = @transform_1, window_bounds = array<i64: 256, 8>}, {pipeline_mode = #tpu.pipeline_mode<synchronous>, transform_indices = @transform_2, window_bounds = array<i64: 8, 256>}, {transform_indices = @transform_3, window_bounds = array<i64: 2, 256>}]} {
    %c0 = arith.constant 0 : index
    %c0_0 = arith.constant 0 : index
    %0 = vector.load %arg2[%c0, %c0_0] : memref<256x8xf32, #tpu.memory_space<vmem>>, vector<256x8xf32>
    %c0_1 = arith.constant 0 : index
    %c0_2 = arith.constant 0 : index
    %1 = vector.load %arg3[%c0_1, %c0_2] : memref<8x256xf32, #tpu.memory_space<vmem>>, vector<8x256xf32>
    %c0_3 = arith.constant 0 : index
    %c0_4 = arith.constant 0 : index
    %2 = vector.load %arg1[%c0_3, %c0_4] : memref<2x256xf32, #tpu.memory_space<vmem>>, vector<2x256xf32>
    %cst = arith.constant dense<0.000000e+00> : vector<2x8xf32>
    %3 = tpu.matmul %2, %0, %cst {dimension_numbers = #tpu.dot_dimension_numbers<[1], [0], [0], [1], [0, 0, 1, 1], [], []>, precision = #tpu.contract_precision<fp32>} : vector<2x256xf32>, vector<256x8xf32>, vector<2x8xf32> -> vector<2x8xf32>
    %cst_5 = arith.constant dense<0xFF800000> : vector<2xf32>
    %4 = vector.multi_reduction <maximumf>, %3, %cst_5 [1] : vector<2x8xf32> to vector<2xf32>
    %5 = vector.shape_cast %4 : vector<2xf32> to vector<2x1xf32>
    %6 = vector.broadcast %5 : vector<2x1xf32> to vector<2x8xf32>
    %7 = arith.subf %3, %6 : vector<2x8xf32>
    %8 = math.exp %7 : vector<2x8xf32>
    %cst_6 = arith.constant dense<0.000000e+00> : vector<2xf32>
    %9 = vector.multi_reduction <add>, %8, %cst_6 [1] : vector<2x8xf32> to vector<2xf32>
    %10 = vector.shape_cast %9 : vector<2xf32> to vector<2x1xf32>
    %11 = vector.broadcast %10 : vector<2x1xf32> to vector<2x8xf32>
    %12 = arith.divf %8, %11 : vector<2x8xf32>
    %cst_7 = arith.constant dense<0.000000e+00> : vector<2x256xf32>
    %13 = tpu.matmul %12, %1, %cst_7 {dimension_numbers = #tpu.dot_dimension_numbers<[1], [0], [0], [1], [0, 0, 1, 1], [], []>} : vector<2x8xf32>, vector<8x256xf32>, vector<2x256xf32> -> vector<2x256xf32>
    %c0_8 = arith.constant 0 : index
    %c0_9 = arith.constant 0 : index
    %14 = vector.load %arg1[%c0_8, %c0_9] : memref<2x256xf32, #tpu.memory_space<vmem>>, vector<2x256xf32>
    %15 = arith.mulf %14, %13 : vector<2x256xf32>
    %c0_10 = arith.constant 0 : index
    %c0_11 = arith.constant 0 : index
    %16 = vector.load %arg4[%c0_10, %c0_11] : memref<2x256xf32, #tpu.memory_space<vmem>>, vector<2x256xf32>
    tpu.vector_store %arg4[%c0_10, %c0_11], %15 {strides = array<i32>} : memref<2x256xf32, #tpu.memory_space<vmem>>, vector<2x256xf32>,
    return
  }
  func.func @transform_0(%arg0: i32) -> (i32, i32) {
    %c0_i32 = arith.constant 0 : i32
    %c0_i32_0 = arith.constant 0 : i32
    return %arg0, %c0_i32 : i32, i32
  }
  func.func @transform_1(%arg0: i32) -> (i32, i32) {
    %c0_i32 = arith.constant 0 : i32
    %c0_i32_0 = arith.constant 0 : i32
    %c0_i32_1 = arith.constant 0 : i32
    return %c0_i32, %c0_i32_0 : i32, i32
  }
  func.func @transform_2(%arg0: i32) -> (i32, i32) {
    %c0_i32 = arith.constant 0 : i32
    %c0_i32_0 = arith.constant 0 : i32
    %c0_i32_1 = arith.constant 0 : i32
    return %c0_i32, %c0_i32_0 : i32, i32
  }
  func.func @transform_3(%arg0: i32) -> (i32, i32) {
    %c0_i32 = arith.constant 0 : i32
    %c0_i32_0 = arith.constant 0 : i32
    return %arg0, %c0_i32 : i32, i32
  }
}

</mosaic_0001>

<llo_original>
// kernel: tpu_custom_call.1
$region0: #{tpu_custom_call.1}
  #allocation0 [shape = 'u32[]', space=smem, size = 0x4, offset = 0x4, fixed_abs, tag = 'smem constant byte address 0x4 - core index']
  #allocation1 [shape = 'u32[72,128]{1,0:T(1,128)}', space=vmem, size = 0x9000, scoped, tag = 'internal scratch']
  %s0 = inlined_call_operand.vmem [shape: f32[2,256], index: 0, kind: input, shape index: {}]
  %s1 = inlined_call_operand.vmem [shape: f32[256,8], index: 1, kind: input, shape index: {}]
  %s2 = inlined_call_operand.vmem [shape: f32[8,256], index: 2, kind: input, shape index: {}]
  %s3 = inlined_call_operand.hbm [shape: f32[2,256], index: 3, kind: output, shape index: {}]
  %s4 = sld [smem:[#allocation0]]
  $region22: #{tpu_custom_call.1} parent=0
    _
  %s6 = ssub.s32 1, %s4
  %s7 = scalar_select 0, %s6, %s4
  $region1: #{tpu_custom_call.1} parent=0
    #allocation2 [shape = 'u8[2048]{0}', space=vmem, size = 0x800, scoped, tag = 'output window, operand 0, single buffered']
    #allocation3 [shape = 's32[1]{0}', space=sflag, size = 0x4, scoped, tag = 'scoped memory for tpu_custom_call.1']
    %8 = vsyncpa [#allocation3], 0
    // Predicated region
    $region2: #{tpu_custom_call.1} parent=1 // pred_check
      _
    $region3: #{tpu_custom_call.1} parent=1 // pred_check_branch
      %10 = sbr.rel (0) target = $region5
    $region4: #{tpu_custom_call.1} parent=1 // pred_region
      _
    $region5: #{tpu_custom_call.1} parent=1 // pred_fallthru
      _
    // Predicated region
    $region6: #{tpu_custom_call.1} parent=1 // pred_check
      _
    $region7: #{tpu_custom_call.1} parent=1 // pred_check_branch
      %12 = sbr.rel (0) target = $region9
    $region8: #{tpu_custom_call.1} parent=1 // pred_region
      _
    $region9: #{tpu_custom_call.1} parent=1 // pred_fallthru
      _
    // Predicated region
    $region10: #{tpu_custom_call.1} parent=1 // pred_check
      _
    $region11: #{tpu_custom_call.1} parent=1 // pred_check_branch
      %14 = sbr.rel (0) target = $region13
    $region12: #{tpu_custom_call.1} parent=1 // pred_region
      _
    $region13: #{tpu_custom_call.1} parent=1 // pred_fallthru
      _
    %v15 = vld [vmem:[%s1] sm:$0xff]
    %v16 = vld [vmem:[%s1 + $0x8] sm:$0xff]
    %v17 = vld [vmem:[%s1 + $0x10] sm:$0xff]
    %v18 = vld [vmem:[%s1 + $0x18] sm:$0xff]
    %v19 = vld [vmem:[%s1 + $0x20] sm:$0xff]
    %v20 = vld [vmem:[%s1 + $0x28] sm:$0xff]
    %v21 = vld [vmem:[%s1 + $0x30] sm:$0xff]
    %v22 = vld [vmem:[%s1 + $0x38] sm:$0xff]
    %v23 = vld [vmem:[%s1 + $0x40] sm:$0xff]
    %v24 = vld [vmem:[%s1 + $0x48] sm:$0xff]
    %v25 = vld [vmem:[%s1 + $0x50] sm:$0xff]
    %v26 = vld [vmem:[%s1 + $0x58] sm:$0xff]
    %v27 = vld [vmem:[%s1 + $0x60] sm:$0xff]
    %v28 = vld [vmem:[%s1 + $0x68] sm:$0xff]
    %v29 = vld [vmem:[%s1 + $0x70] sm:$0xff]
    %v30 = vld [vmem:[%s1 + $0x78] sm:$0xff]
    %v31 = vld [vmem:[%s1 + $0x80] sm:$0xff]
    %v32 = vld [vmem:[%s1 + $0x88] sm:$0xff]
    %v33 = vld [vmem:[%s1 + $0x90] sm:$0xff]
    %v34 = vld [vmem:[%s1 + $0x98] sm:$0xff]
    %v35 = vld [vmem:[%s1 + $0xa0] sm:$0xff]
    %v36 = vld [vmem:[%s1 + $0xa8] sm:$0xff]
    %v37 = vld [vmem:[%s1 + $0xb0] sm:$0xff]
    %v38 = vld [vmem:[%s1 + $0xb8] sm:$0xff]
    %v39 = vld [vmem:[%s1 + $0xc0] sm:$0xff]
    %v40 = vld [vmem:[%s1 + $0xc8] sm:$0xff]
    %v41 = vld [vmem:[%s1 + $0xd0] sm:$0xff]
    %v42 = vld [vmem:[%s1 + $0xd8] sm:$0xff]
    %v43 = vld [vmem:[%s1 + $0xe0] sm:$0xff]
    %v44 = vld [vmem:[%s1 + $0xe8] sm:$0xff]
    %v45 = vld [vmem:[%s1 + $0xf0] sm:$0xff]
    %v46 = vld [vmem:[%s1 + $0xf8] sm:$0xff]
    %v47 = vld [vmem:[%s2] sm:$0xff]
    %v48 = vld [vmem:[%s2 + $0x8] sm:$0xff]
    %v49 = vld [vmem:[%s0] sm:$0xf]
    %51 = vst [vmem:[#allocation1] ss:$4 sm:$0xff] %v49
    %v52 = vld.sshfl [vmem:[#allocation1] sm:$0xff pattern:$0x73625140]
    %v53 = vld.sshfl [vmem:[#allocation1 + $0x8] sm:$0xff pattern:$0x73625140]
    %v56 = vand.u32 %v30, 4294901760
    %57 = vmatpush.msra.mxu0 %v56
    %v58 = vand.u32 %v29, 4294901760
    %59 = vmatpush.msra.mxu0 %v58
    %v60 = vand.u32 %v28, 4294901760
    %61 = vmatpush.msra.mxu0 %v60
    %v62 = vand.u32 %v27, 4294901760
    %63 = vmatpush.msra.mxu0 %v62
    %v64 = vand.u32 %v26, 4294901760
    %65 = vmatpush.msra.mxu0 %v64
    %v66 = vand.u32 %v25, 4294901760
    %67 = vmatpush.msra.mxu0 %v66
    %v68 = vand.u32 %v24, 4294901760
    %69 = vmatpush.msra.mxu0 %v68
    %v70 = vand.u32 %v23, 4294901760
    %71 = vmatpush.msra.mxu0 %v70
    %v72 = vand.u32 %v22, 4294901760
    %73 = vmatpush.msra.mxu0 %v72
    %v74 = vand.u32 %v21, 4294901760
    %75 = vmatpush.msra.mxu0 %v74
    %v76 = vand.u32 %v20, 4294901760
    %77 = vmatpush.msra.mxu0 %v76
    %v78 = vand.u32 %v19, 4294901760
    %79 = vmatpush.msra.mxu0 %v78
    %v80 = vand.u32 %v18, 4294901760
    %81 = vmatpush.msra.mxu0 %v80
    %v82 = vand.u32 %v17, 4294901760
    %83 = vmatpush.msra.mxu0 %v82
    %v84 = vand.u32 %v16, 4294901760
    %85 = vmatpush.msra.mxu0 %v84
    %v86 = vand.u32 %v15, 4294901760
    %87 = vmatpush.msra.mxu0 %v86
    %v88 = vand.u32 %v52, 4294901760
    %v89 = vsub.f32 %v52, %v88
    %v90 = vand.u32 %v89, 4294901760
    %v91 = vsub.f32 %v89, %v90
    %v92 = vand.u32 %v91, 4294901760
    %93 = vmatmul.f32.gmra.mxu0 %v92
    %v94 = vpop.f32.mrf.mxu0
    %v95 = vadd.f32 0.0, %v94
    %96 = vdwg.mxu0
    %v97 = vand.u32 %v30, 4294901760
    %v98 = vsub.f32 %v30, %v97
    %v99 = vand.u32 %v98, 4294901760
    %v100 = vsub.f32 %v98, %v99
    %v101 = vand.u32 %v100, 4294901760
    %102 = vmatpush.msra.mxu0 %v101
    %v103 = vand.u32 %v29, 4294901760
    %v104 = vsub.f32 %v29, %v103
    %v105 = vand.u32 %v104, 4294901760
    %v106 = vsub.f32 %v104, %v105
    %v107 = vand.u32 %v106, 4294901760
    %108 = vmatpush.msra.mxu0 %v107
    %v109 = vand.u32 %v28, 4294901760
    %v110 = vsub.f32 %v28, %v109
    %v111 = vand.u32 %v110, 4294901760
    %v112 = vsub.f32 %v110, %v111
    %v113 = vand.u32 %v112, 4294901760
    %114 = vmatpush.msra.mxu0 %v113
    %v115 = vand.u32 %v27, 4294901760
    %v116 = vsub.f32 %v27, %v115
    %v117 = vand.u32 %v116, 4294901760
    %v118 = vsub.f32 %v116, %v117
    %v119 = vand.u32 %v118, 4294901760
    %120 = vmatpush.msra.mxu0 %v119
    %v121 = vand.u32 %v26, 4294901760
    %v122 = vsub.f32 %v26, %v121
    %v123 = vand.u32 %v122, 4294901760
    %v124 = vsub.f32 %v122, %v123
    %v125 = vand.u32 %v124, 4294901760
    %126 = vmatpush.msra.mxu0 %v125
    %v127 = vand.u32 %v25, 4294901760
    %v128 = vsub.f32 %v25, %v127
    %v129 = vand.u32 %v128, 4294901760
    %v130 = vsub.f32 %v128, %v129
    %v131 = vand.u32 %v130, 4294901760
    %132 = vmatpush.msra.mxu0 %v131
    %v133 = vand.u32 %v24, 4294901760
    %v134 = vsub.f32 %v24, %v133
    %v135 = vand.u32 %v134, 4294901760
    %v136 = vsub.f32 %v134, %v135
    %v137 = vand.u32 %v136, 4294901760
    %138 = vmatpush.msra.mxu0 %v137
    %v139 = vand.u32 %v23, 4294901760
    %v140 = vsub.f32 %v23, %v139
    %v141 = vand.u32 %v140, 4294901760
    %v142 = vsub.f32 %v140, %v141
    %v143 = vand.u32 %v142, 4294901760
    %144 = vmatpush.msra.mxu0 %v143
    %v145 = vand.u32 %v22, 4294901760
    %v146 = vsub.f32 %v22, %v145
    %v147 = vand.u32 %v146, 4294901760
    %v148 = vsub.f32 %v146, %v147
    %v149 = vand.u32 %v148, 4294901760
    %150 = vmatpush.msra.mxu0 %v149
    %v151 = vand.u32 %v21, 4294901760
    %v152 = vsub.f32 %v21, %v151
    %v153 = vand.u32 %v152, 4294901760
    %v154 = vsub.f32 %v152, %v153
    %v155 = vand.u32 %v154, 4294901760
    %156 = vmatpush.msra.mxu0 %v155
    %v157 = vand.u32 %v20, 4294901760
    %v158 = vsub.f32 %v20, %v157
    %v159 = vand.u32 %v158, 4294901760
    %v160 = vsub.f32 %v158, %v159
    %v161 = vand.u32 %v160, 4294901760
    %162 = vmatpush.msra.mxu0 %v161
    %v163 = vand.u32 %v19, 4294901760
    %v164 = vsub.f32 %v19, %v163
    %v165 = vand.u32 %v164, 4294901760
    %v166 = vsub.f32 %v164, %v165
    %v167 = vand.u32 %v166, 4294901760
    %168 = vmatpush.msra.mxu0 %v167
    %v169 = vand.u32 %v18, 4294901760
    %v170 = vsub.f32 %v18, %v169
    %v171 = vand.u32 %v170, 4294901760
    %v172 = vsub.f32 %v170, %v171
    %v173 = vand.u32 %v172, 4294901760
    %174 = vmatpush.msra.mxu0 %v173
    %v175 = vand.u32 %v17, 4294901760
    %v176 = vsub.f32 %v17, %v175
    %v177 = vand.u32 %v176, 4294901760
    %v178 = vsub.f32 %v176, %v177
    %v179 = vand.u32 %v178, 4294901760
    %180 = vmatpush.msra.mxu0 %v179
    %v181 = vand.u32 %v16, 4294901760
    %v182 = vsub.f32 %v16, %v181
    %v183 = vand.u32 %v182, 4294901760
    %v184 = vsub.f32 %v182, %v183
    %v185 = vand.u32 %v184, 4294901760
    %186 = vmatpush.msra.mxu0 %v185
    %v187 = vand.u32 %v15, 4294901760
    %v188 = vsub.f32 %v15, %v187
    %v189 = vand.u32 %v188, 4294901760
    %v190 = vsub.f32 %v188, %v189
    %v191 = vand.u32 %v190, 4294901760
    %192 = vmatpush.msra.mxu0 %v191
    %v193 = vand.u32 %v52, 4294901760
    %194 = vmatmul.f32.gmra.mxu0 %v193
    %v195 = vpop.f32.mrf.mxu0
    %v196 = vadd.f32 %v95, %v195
    %197 = vdwg.mxu0
    %v198 = vand.u32 %v30, 4294901760
    %v199 = vsub.f32 %v30, %v198
    %200 = vmatpush.msra.mxu0 %v199
    %v201 = vand.u32 %v29, 4294901760
    %v202 = vsub.f32 %v29, %v201
    %203 = vmatpush.msra.mxu0 %v202
    %v204 = vand.u32 %v28, 4294901760
    %v205 = vsub.f32 %v28, %v204
    %206 = vmatpush.msra.mxu0 %v205
    %v207 = vand.u32 %v27, 4294901760
    %v208 = vsub.f32 %v27, %v207
    %209 = vmatpush.msra.mxu0 %v208
    %v210 = vand.u32 %v26, 4294901760
    %v211 = vsub.f32 %v26, %v210
    %212 = vmatpush.msra.mxu0 %v211
    %v213 = vand.u32 %v25, 4294901760
    %v214 = vsub.f32 %v25, %v213
    %215 = vmatpush.msra.mxu0 %v214
    %v216 = vand.u32 %v24, 4294901760
    %v217 = vsub.f32 %v24, %v216
    %218 = vmatpush.msra.mxu0 %v217
    %v219 = vand.u32 %v23, 4294901760
    %v220 = vsub.f32 %v23, %v219
    %221 = vmatpush.msra.mxu0 %v220
    %v222 = vand.u32 %v22, 4294901760
    %v223 = vsub.f32 %v22, %v222
    %224 = vmatpush.msra.mxu0 %v223
    %v225 = vand.u32 %v21, 4294901760
    %v226 = vsub.f32 %v21, %v225
    %227 = vmatpush.msra.mxu0 %v226
    %v228 = vand.u32 %v20, 4294901760
    %v229 = vsub.f32 %v20, %v228
    %230 = vmatpush.msra.mxu0 %v229
    %v231 = vand.u32 %v19, 4294901760
    %v232 = vsub.f32 %v19, %v231
    %233 = vmatpush.msra.mxu0 %v232
    %v234 = vand.u32 %v18, 4294901760
    %v235 = vsub.f32 %v18, %v234
    %236 = vmatpush.msra.mxu0 %v235
    %v237 = vand.u32 %v17, 4294901760
    %v238 = vsub.f32 %v17, %v237
    %239 = vmatpush.msra.mxu0 %v238
    %v240 = vand.u32 %v16, 4294901760
    %v241 = vsub.f32 %v16, %v240
    %242 = vmatpush.msra.mxu0 %v241
    %v243 = vand.u32 %v15, 4294901760
    %v244 = vsub.f32 %v15, %v243
    %245 = vmatpush.msra.mxu0 %v244
    %v246 = vand.u32 %v52, 4294901760
    %v247 = vsub.f32 %v52, %v246
    %248 = vmatmul.f32.gmra.mxu0 %v247
    %v249 = vpop.f32.mrf.mxu0
    %v250 = vadd.f32 %v196, %v249
    %251 = vdwg.mxu0
    %v252 = vand.u32 %v30, 4294901760
    %253 = vmatpush.msra.mxu0 %v252
    %v254 = vand.u32 %v29, 4294901760
    %255 = vmatpush.msra.mxu0 %v254
    %v256 = vand.u32 %v28, 4294901760
    %257 = vmatpush.msra.mxu0 %v256
    %v258 = vand.u32 %v27, 4294901760
    %259 = vmatpush.msra.mxu0 %v258
    %v260 = vand.u32 %v26, 4294901760
    %261 = vmatpush.msra.mxu0 %v260
    %v262 = vand.u32 %v25, 4294901760
    %263 = vmatpush.msra.mxu0 %v262
    %v264 = vand.u32 %v24, 4294901760
    %265 = vmatpush.msra.mxu0 %v264
    %v266 = vand.u32 %v23, 4294901760
    %267 = vmatpush.msra.mxu0 %v266
    %v268 = vand.u32 %v22, 4294901760
    %269 = vmatpush.msra.mxu0 %v268
    %v270 = vand.u32 %v21, 4294901760
    %271 = vmatpush.msra.mxu0 %v270
    %v272 = vand.u32 %v20, 4294901760
    %273 = vmatpush.msra.mxu0 %v272
    %v274 = vand.u32 %v19, 4294901760
    %275 = vmatpush.msra.mxu0 %v274
    %v276 = vand.u32 %v18, 4294901760
    %277 = vmatpush.msra.mxu0 %v276
    %v278 = vand.u32 %v17, 4294901760
    %279 = vmatpush.msra.mxu0 %v278
    %v280 = vand.u32 %v16, 4294901760
    %281 = vmatpush.msra.mxu0 %v280
    %v282 = vand.u32 %v15, 4294901760
    %283 = vmatpush.msra.mxu0 %v282
    %v284 = vand.u32 %v52, 4294901760
    %v285 = vsub.f32 %v52, %v284
    %v286 = vand.u32 %v285, 4294901760
    %287 = vmatmul.f32.gmra.mxu0 %v286
    %v288 = vpop.f32.mrf.mxu0
    %v289 = vadd.f32 %v250, %v288
    %290 = vdwg.mxu0
    %v291 = vand.u32 %v30, 4294901760
    %v292 = vsub.f32 %v30, %v291
    %v293 = vand.u32 %v292, 4294901760
    %294 = vmatpush.msra.mxu0 %v293
    %v295 = vand.u32 %v29, 4294901760
    %v296 = vsub.f32 %v29, %v295
    %v297 = vand.u32 %v296, 4294901760
    %298 = vmatpush.msra.mxu0 %v297
    %v299 = vand.u32 %v28, 4294901760
    %v300 = vsub.f32 %v28, %v299
    %v301 = vand.u32 %v300, 4294901760
    %302 = vmatpush.msra.mxu0 %v301
    %v303 = vand.u32 %v27, 4294901760
    %v304 = vsub.f32 %v27, %v303
    %v305 = vand.u32 %v304, 4294901760
    %306 = vmatpush.msra.mxu0 %v305
    %v307 = vand.u32 %v26, 4294901760
    %v308 = vsub.f32 %v26, %v307
    %v309 = vand.u32 %v308, 4294901760
    %310 = vmatpush.msra.mxu0 %v309
    %v311 = vand.u32 %v25, 4294901760
    %v312 = vsub.f32 %v25, %v311
    %v313 = vand.u32 %v312, 4294901760
    %314 = vmatpush.msra.mxu0 %v313
    %v315 = vand.u32 %v24, 4294901760
    %v316 = vsub.f32 %v24, %v315
    %v317 = vand.u32 %v316, 4294901760
    %318 = vmatpush.msra.mxu0 %v317
    %v319 = vand.u32 %v23, 4294901760
    %v320 = vsub.f32 %v23, %v319
    %v321 = vand.u32 %v320, 4294901760
    %322 = vmatpush.msra.mxu0 %v321
    %v323 = vand.u32 %v22, 4294901760
    %v324 = vsub.f32 %v22, %v323
    %v325 = vand.u32 %v324, 4294901760
    %326 = vmatpush.msra.mxu0 %v325
    %v327 = vand.u32 %v21, 4294901760
    %v328 = vsub.f32 %v21, %v327
    %v329 = vand.u32 %v328, 4294901760
    %330 = vmatpush.msra.mxu0 %v329
    %v331 = vand.u32 %v20, 4294901760
    %v332 = vsub.f32 %v20, %v331
    %v333 = vand.u32 %v332, 4294901760
    %334 = vmatpush.msra.mxu0 %v333
    %v335 = vand.u32 %v19, 4294901760
    %v336 = vsub.f32 %v19, %v335
    %v337 = vand.u32 %v336, 4294901760
    %338 = vmatpush.msra.mxu0 %v337
    %v339 = vand.u32 %v18, 4294901760
    %v340 = vsub.f32 %v18, %v339
    %v341 = vand.u32 %v340, 4294901760
    %342 = vmatpush.msra.mxu0 %v341
    %v343 = vand.u32 %v17, 4294901760
    %v344 = vsub.f32 %v17, %v343
    %v345 = vand.u32 %v344, 4294901760
    %346 = vmatpush.msra.mxu0 %v345
    %v347 = vand.u32 %v16, 4294901760
    %v348 = vsub.f32 %v16, %v347
    %v349 = vand.u32 %v348, 4294901760
    %350 = vmatpush.msra.mxu0 %v349
    %v351 = vand.u32 %v15, 4294901760
    %v352 = vsub.f32 %v15, %v351
    %v353 = vand.u32 %v352, 4294901760
    %354 = vmatpush.msra.mxu0 %v353
    %v355 = vand.u32 %v52, 4294901760
    %356 = vmatmul.f32.gmra.mxu0 %v355
    %v357 = vpop.f32.mrf.mxu0
    %v358 = vadd.f32 %v289, %v357
    %359 = vdwg.mxu0
    %v360 = vand.u32 %v30, 4294901760
    %361 = vmatpush.msra.mxu0 %v360
    %v362 = vand.u32 %v29, 4294901760
    %363 = vmatpush.msra.mxu0 %v362
    %v364 = vand.u32 %v28, 4294901760
    %365 = vmatpush.msra.mxu0 %v364
    %v366 = vand.u32 %v27, 4294901760
    %367 = vmatpush.msra.mxu0 %v366
    %v368 = vand.u32 %v26, 4294901760
    %369 = vmatpush.msra.mxu0 %v368
    %v370 = vand.u32 %v25, 4294901760
    %371 = vmatpush.msra.mxu0 %v370
    %v372 = vand.u32 %v24, 4294901760
    %373 = vmatpush.msra.mxu0 %v372
    %v374 = vand.u32 %v23, 4294901760
    %375 = vmatpush.msra.mxu0 %v374
    %v376 = vand.u32 %v22, 4294901760
    %377 = vmatpush.msra.mxu0 %v376
    %v378 = vand.u32 %v21, 4294901760
    %379 = vmatpush.msra.mxu0 %v378
    %v380 = vand.u32 %v20, 4294901760
    %381 = vmatpush.msra.mxu0 %v380
    %v382 = vand.u32 %v19, 4294901760
    %383 = vmatpush.msra.mxu0 %v382
    %v384 = vand.u32 %v18, 4294901760
    %385 = vmatpush.msra.mxu0 %v384
    %v386 = vand.u32 %v17, 4294901760
    %387 = vmatpush.msra.mxu0 %v386
    %v388 = vand.u32 %v16, 4294901760
    %389 = vmatpush.msra.mxu0 %v388
    %v390 = vand.u32 %v15, 4294901760
    %391 = vmatpush.msra.mxu0 %v390
    %v392 = vand.u32 %v52, 4294901760
    %393 = vmatmul.f32.gmra.mxu0 %v392
    %v394 = vpop.f32.mrf.mxu0
    %v395 = vadd.f32 %v358, %v394
    %396 = vdwg.mxu0
    %v397 = vand.u32 %v46, 4294901760
    %398 = vmatpush.msra.mxu0 %v397
    %v399 = vand.u32 %v45, 4294901760
    %400 = vmatpush.msra.mxu0 %v399
    %v401 = vand.u32 %v44, 4294901760
    %402 = vmatpush.msra.mxu0 %v401
    %v403 = vand.u32 %v43, 4294901760
    %404 = vmatpush.msra.mxu0 %v403
    %v405 = vand.u32 %v42, 4294901760
    %406 = vmatpush.msra.mxu0 %v405
    %v407 = vand.u32 %v41, 4294901760
    %408 = vmatpush.msra.mxu0 %v407
    %v409 = vand.u32 %v40, 4294901760
    %410 = vmatpush.msra.mxu0 %v409
    %v411 = vand.u32 %v39, 4294901760
    %412 = vmatpush.msra.mxu0 %v411
    %v413 = vand.u32 %v38, 4294901760
    %414 = vmatpush.msra.mxu0 %v413
    %v415 = vand.u32 %v37, 4294901760
    %416 = vmatpush.msra.mxu0 %v415
    %v417 = vand.u32 %v36, 4294901760
    %418 = vmatpush.msra.mxu0 %v417
    %v419 = vand.u32 %v35, 4294901760
    %420 = vmatpush.msra.mxu0 %v419
    %v421 = vand.u32 %v34, 4294901760
    %422 = vmatpush.msra.mxu0 %v421
    %v423 = vand.u32 %v33, 4294901760
    %424 = vmatpush.msra.mxu0 %v423
    %v425 = vand.u32 %v32, 4294901760
    %426 = vmatpush.msra.mxu0 %v425
    %v427 = vand.u32 %v31, 4294901760
    %428 = vmatpush.msra.mxu0 %v427
    %v429 = vand.u32 %v53, 4294901760
    %v430 = vsub.f32 %v53, %v429
    %v431 = vand.u32 %v430, 4294901760
    %v432 = vsub.f32 %v430, %v431
    %v433 = vand.u32 %v432, 4294901760
    %434 = vmatmul.f32.gmra.mxu0 %v433
    %v435 = vpop.f32.mrf.mxu0
    %v436 = vadd.f32 %v395, %v435
    %437 = vdwg.mxu0
    %v438 = vand.u32 %v46, 4294901760
    %v439 = vsub.f32 %v46, %v438
    %v440 = vand.u32 %v439, 4294901760
    %v441 = vsub.f32 %v439, %v440
    %v442 = vand.u32 %v441, 4294901760
    %443 = vmatpush.msra.mxu0 %v442
    %v444 = vand.u32 %v45, 4294901760
    %v445 = vsub.f32 %v45, %v444
    %v446 = vand.u32 %v445, 4294901760
    %v447 = vsub.f32 %v445, %v446
    %v448 = vand.u32 %v447, 4294901760
    %449 = vmatpush.msra.mxu0 %v448
    %v450 = vand.u32 %v44, 4294901760
    %v451 = vsub.f32 %v44, %v450
    %v452 = vand.u32 %v451, 4294901760
    %v453 = vsub.f32 %v451, %v452
    %v454 = vand.u32 %v453, 4294901760
    %455 = vmatpush.msra.mxu0 %v454
    %v456 = vand.u32 %v43, 4294901760
    %v457 = vsub.f32 %v43, %v456
    %v458 = vand.u32 %v457, 4294901760
    %v459 = vsub.f32 %v457, %v458
    %v460 = vand.u32 %v459, 4294901760
    %461 = vmatpush.msra.mxu0 %v460
    %v462 = vand.u32 %v42, 4294901760
    %v463 = vsub.f32 %v42, %v462
    %v464 = vand.u32 %v463, 4294901760
    %v465 = vsub.f32 %v463, %v464
    %v466 = vand.u32 %v465, 4294901760
    %467 = vmatpush.msra.mxu0 %v466
    %v468 = vand.u32 %v41, 4294901760
    %v469 = vsub.f32 %v41, %v468
    %v470 = vand.u32 %v469, 4294901760
    %v471 = vsub.f32 %v469, %v470
    %v472 = vand.u32 %v471, 4294901760
    %473 = vmatpush.msra.mxu0 %v472
    %v474 = vand.u32 %v40, 4294901760
    %v475 = vsub.f32 %v40, %v474
    %v476 = vand.u32 %v475, 4294901760
    %v477 = vsub.f32 %v475, %v476
    %v478 = vand.u32 %v477, 4294901760
    %479 = vmatpush.msra.mxu0 %v478
    %v480 = vand.u32 %v39, 4294901760
    %v481 = vsub.f32 %v39, %v480
    %v482 = vand.u32 %v481, 4294901760
    %v483 = vsub.f32 %v481, %v482
    %v484 = vand.u32 %v483, 4294901760
    %485 = vmatpush.msra.mxu0 %v484
    %v486 = vand.u32 %v38, 4294901760
    %v487 = vsub.f32 %v38, %v486
    %v488 = vand.u32 %v487, 4294901760
    %v489 = vsub.f32 %v487, %v488
    %v490 = vand.u32 %v489, 4294901760
    %491 = vmatpush.msra.mxu0 %v490
    %v492 = vand.u32 %v37, 4294901760
    %v493 = vsub.f32 %v37, %v492
    %v494 = vand.u32 %v493, 4294901760
    %v495 = vsub.f32 %v493, %v494
    %v496 = vand.u32 %v495, 4294901760
    %497 = vmatpush.msra.mxu0 %v496
    %v498 = vand.u32 %v36, 4294901760
    %v499 = vsub.f32 %v36, %v498
    %v500 = vand.u32 %v499, 4294901760
    %v501 = vsub.f32 %v499, %v500
    %v502 = vand.u32 %v501, 4294901760
    %503 = vmatpush.msra.mxu0 %v502
    %v504 = vand.u32 %v35, 4294901760
    %v505 = vsub.f32 %v35, %v504
    %v506 = vand.u32 %v505, 4294901760
    %v507 = vsub.f32 %v505, %v506
    %v508 = vand.u32 %v507, 4294901760
    %509 = vmatpush.msra.mxu0 %v508
    %v510 = vand.u32 %v34, 4294901760
    %v511 = vsub.f32 %v34, %v510
    %v512 = vand.u32 %v511, 4294901760
    %v513 = vsub.f32 %v511, %v512
    %v514 = vand.u32 %v513, 4294901760
    %515 = vmatpush.msra.mxu0 %v514
    %v516 = vand.u32 %v33, 4294901760
    %v517 = vsub.f32 %v33, %v516
    %v518 = vand.u32 %v517, 4294901760
    %v519 = vsub.f32 %v517, %v518
    %v520 = vand.u32 %v519, 4294901760
    %521 = vmatpush.msra.mxu0 %v520
    %v522 = vand.u32 %v32, 4294901760
    %v523 = vsub.f32 %v32, %v522
    %v524 = vand.u32 %v523, 4294901760
    %v525 = vsub.f32 %v523, %v524
    %v526 = vand.u32 %v525, 4294901760
    %527 = vmatpush.msra.mxu0 %v526
    %v528 = vand.u32 %v31, 4294901760
    %v529 = vsub.f32 %v31, %v528
    %v530 = vand.u32 %v529, 4294901760
    %v531 = vsub.f32 %v529, %v530
    %v532 = vand.u32 %v531, 4294901760
    %533 = vmatpush.msra.mxu0 %v532
    %v534 = vand.u32 %v53, 4294901760
    %535 = vmatmul.f32.gmra.mxu0 %v534
    %v536 = vpop.f32.mrf.mxu0
    %v537 = vadd.f32 %v436, %v536
    %538 = vdwg.mxu0
    %v539 = vand.u32 %v46, 4294901760
    %v540 = vsub.f32 %v46, %v539
    %541 = vmatpush.msra.mxu0 %v540
    %v542 = vand.u32 %v45, 4294901760
    %v543 = vsub.f32 %v45, %v542
    %544 = vmatpush.msra.mxu0 %v543
    %v545 = vand.u32 %v44, 4294901760
    %v546 = vsub.f32 %v44, %v545
    %547 = vmatpush.msra.mxu0 %v546
    %v548 = vand.u32 %v43, 4294901760
    %v549 = vsub.f32 %v43, %v548
    %550 = vmatpush.msra.mxu0 %v549
    %v551 = vand.u32 %v42, 4294901760
    %v552 = vsub.f32 %v42, %v551
    %553 = vmatpush.msra.mxu0 %v552
    %v554 = vand.u32 %v41, 4294901760
    %v555 = vsub.f32 %v41, %v554
    %556 = vmatpush.msra.mxu0 %v555
    %v557 = vand.u32 %v40, 4294901760
    %v558 = vsub.f32 %v40, %v557
    %559 = vmatpush.msra.mxu0 %v558
    %v560 = vand.u32 %v39, 4294901760
    %v561 = vsub.f32 %v39, %v560
    %562 = vmatpush.msra.mxu0 %v561
    %v563 = vand.u32 %v38, 4294901760
    %v564 = vsub.f32 %v38, %v563
    %565 = vmatpush.msra.mxu0 %v564
    %v566 = vand.u32 %v37, 4294901760
    %v567 = vsub.f32 %v37, %v566
    %568 = vmatpush.msra.mxu0 %v567
    %v569 = vand.u32 %v36, 4294901760
    %v570 = vsub.f32 %v36, %v569
    %571 = vmatpush.msra.mxu0 %v570
    %v572 = vand.u32 %v35, 4294901760
    %v573 = vsub.f32 %v35, %v572
    %574 = vmatpush.msra.mxu0 %v573
    %v575 = vand.u32 %v34, 4294901760
    %v576 = vsub.f32 %v34, %v575
    %577 = vmatpush.msra.mxu0 %v576
    %v578 = vand.u32 %v33, 4294901760
    %v579 = vsub.f32 %v33, %v578
    %580 = vmatpush.msra.mxu0 %v579
    %v581 = vand.u32 %v32, 4294901760
    %v582 = vsub.f32 %v32, %v581
    %583 = vmatpush.msra.mxu0 %v582
    %v584 = vand.u32 %v31, 4294901760
    %v585 = vsub.f32 %v31, %v584
    %586 = vmatpush.msra.mxu0 %v585
    %v587 = vand.u32 %v53, 4294901760
    %v588 = vsub.f32 %v53, %v587
    %589 = vmatmul.f32.gmra.mxu0 %v588
    %v590 = vpop.f32.mrf.mxu0
    %v591 = vadd.f32 %v537, %v590
    %592 = vdwg.mxu0
    %v593 = vand.u32 %v46, 4294901760
    %594 = vmatpush.msra.mxu0 %v593
    %v595 = vand.u32 %v45, 4294901760
    %596 = vmatpush.msra.mxu0 %v595
    %v597 = vand.u32 %v44, 4294901760
    %598 = vmatpush.msra.mxu0 %v597
    %v599 = vand.u32 %v43, 4294901760
    %600 = vmatpush.msra.mxu0 %v599
    %v601 = vand.u32 %v42, 4294901760
    %602 = vmatpush.msra.mxu0 %v601
    %v603 = vand.u32 %v41, 4294901760
    %604 = vmatpush.msra.mxu0 %v603
    %v605 = vand.u32 %v40, 4294901760
    %606 = vmatpush.msra.mxu0 %v605
    %v607 = vand.u32 %v39, 4294901760
    %608 = vmatpush.msra.mxu0 %v607
    %v609 = vand.u32 %v38, 4294901760
    %610 = vmatpush.msra.mxu0 %v609
    %v611 = vand.u32 %v37, 4294901760
    %612 = vmatpush.msra.mxu0 %v611
    %v613 = vand.u32 %v36, 4294901760
    %614 = vmatpush.msra.mxu0 %v613
    %v615 = vand.u32 %v35, 4294901760
    %616 = vmatpush.msra.mxu0 %v615
    %v617 = vand.u32 %v34, 4294901760
    %618 = vmatpush.msra.mxu0 %v617
    %v619 = vand.u32 %v33, 4294901760
    %620 = vmatpush.msra.mxu0 %v619
    %v621 = vand.u32 %v32, 4294901760
    %622 = vmatpush.msra.mxu0 %v621
    %v623 = vand.u32 %v31, 4294901760
    %624 = vmatpush.msra.mxu0 %v623
    %v625 = vand.u32 %v53, 4294901760
    %v626 = vsub.f32 %v53, %v625
    %v627 = vand.u32 %v626, 4294901760
    %628 = vmatmul.f32.gmra.mxu0 %v627
    %v629 = vpop.f32.mrf.mxu0
    %v630 = vadd.f32 %v591, %v629
    %631 = vdwg.mxu0
    %v632 = vand.u32 %v46, 4294901760
    %v633 = vsub.f32 %v46, %v632
    %v634 = vand.u32 %v633, 4294901760
    %635 = vmatpush.msra.mxu0 %v634
    %v636 = vand.u32 %v45, 4294901760
    %v637 = vsub.f32 %v45, %v636
    %v638 = vand.u32 %v637, 4294901760
    %639 = vmatpush.msra.mxu0 %v638
    %v640 = vand.u32 %v44, 4294901760
    %v641 = vsub.f32 %v44, %v640
    %v642 = vand.u32 %v641, 4294901760
    %643 = vmatpush.msra.mxu0 %v642
    %v644 = vand.u32 %v43, 4294901760
    %v645 = vsub.f32 %v43, %v644
    %v646 = vand.u32 %v645, 4294901760
    %647 = vmatpush.msra.mxu0 %v646
    %v648 = vand.u32 %v42, 4294901760
    %v649 = vsub.f32 %v42, %v648
    %v650 = vand.u32 %v649, 4294901760
    %651 = vmatpush.msra.mxu0 %v650
    %v652 = vand.u32 %v41, 4294901760
    %v653 = vsub.f32 %v41, %v652
    %v654 = vand.u32 %v653, 4294901760
    %655 = vmatpush.msra.mxu0 %v654
    %v656 = vand.u32 %v40, 4294901760
    %v657 = vsub.f32 %v40, %v656
    %v658 = vand.u32 %v657, 4294901760
    %659 = vmatpush.msra.mxu0 %v658
    %v660 = vand.u32 %v39, 4294901760
    %v661 = vsub.f32 %v39, %v660
    %v662 = vand.u32 %v661, 4294901760
    %663 = vmatpush.msra.mxu0 %v662
    %v664 = vand.u32 %v38, 4294901760
    %v665 = vsub.f32 %v38, %v664
    %v666 = vand.u32 %v665, 4294901760
    %667 = vmatpush.msra.mxu0 %v666
    %v668 = vand.u32 %v37, 4294901760
    %v669 = vsub.f32 %v37, %v668
    %v670 = vand.u32 %v669, 4294901760
    %671 = vmatpush.msra.mxu0 %v670
    %v672 = vand.u32 %v36, 4294901760
    %v673 = vsub.f32 %v36, %v672
    %v674 = vand.u32 %v673, 4294901760
    %675 = vmatpush.msra.mxu0 %v674
    %v676 = vand.u32 %v35, 4294901760
    %v677 = vsub.f32 %v35, %v676
    %v678 = vand.u32 %v677, 4294901760
    %679 = vmatpush.msra.mxu0 %v678
    %v680 = vand.u32 %v34, 4294901760
    %v681 = vsub.f32 %v34, %v680
    %v682 = vand.u32 %v681, 4294901760
    %683 = vmatpush.msra.mxu0 %v682
    %v684 = vand.u32 %v33, 4294901760
    %v685 = vsub.f32 %v33, %v684
    %v686 = vand.u32 %v685, 4294901760
    %687 = vmatpush.msra.mxu0 %v686
    %v688 = vand.u32 %v32, 4294901760
    %v689 = vsub.f32 %v32, %v688
    %v690 = vand.u32 %v689, 4294901760
    %691 = vmatpush.msra.mxu0 %v690
    %v692 = vand.u32 %v31, 4294901760
    %v693 = vsub.f32 %v31, %v692
    %v694 = vand.u32 %v693, 4294901760
    %695 = vmatpush.msra.mxu0 %v694
    %v696 = vand.u32 %v53, 4294901760
    %697 = vmatmul.f32.gmra.mxu0 %v696
    %v698 = vpop.f32.mrf.mxu0
    %v699 = vadd.f32 %v630, %v698
    %700 = vdwg.mxu0
    %v701 = vand.u32 %v46, 4294901760
    %702 = vmatpush.msra.mxu0 %v701
    %v703 = vand.u32 %v45, 4294901760
    %704 = vmatpush.msra.mxu0 %v703
    %v705 = vand.u32 %v44, 4294901760
    %706 = vmatpush.msra.mxu0 %v705
    %v707 = vand.u32 %v43, 4294901760
    %708 = vmatpush.msra.mxu0 %v707
    %v709 = vand.u32 %v42, 4294901760
    %710 = vmatpush.msra.mxu0 %v709
    %v711 = vand.u32 %v41, 4294901760
    %712 = vmatpush.msra.mxu0 %v711
    %v713 = vand.u32 %v40, 4294901760
    %714 = vmatpush.msra.mxu0 %v713
    %v715 = vand.u32 %v39, 4294901760
    %716 = vmatpush.msra.mxu0 %v715
    %v717 = vand.u32 %v38, 4294901760
    %718 = vmatpush.msra.mxu0 %v717
    %v719 = vand.u32 %v37, 4294901760
    %720 = vmatpush.msra.mxu0 %v719
    %v721 = vand.u32 %v36, 4294901760
    %722 = vmatpush.msra.mxu0 %v721
    %v723 = vand.u32 %v35, 4294901760
    %724 = vmatpush.msra.mxu0 %v723
    %v725 = vand.u32 %v34, 4294901760
    %726 = vmatpush.msra.mxu0 %v725
    %v727 = vand.u32 %v33, 4294901760
    %728 = vmatpush.msra.mxu0 %v727
    %v729 = vand.u32 %v32, 4294901760
    %730 = vmatpush.msra.mxu0 %v729
    %v731 = vand.u32 %v31, 4294901760
    %732 = vmatpush.msra.mxu0 %v731
    %v733 = vand.u32 %v53, 4294901760
    %734 = vmatmul.f32.gmra.mxu0 %v733
    %v735 = vpop.f32.mrf.mxu0
    %v736 = vadd.f32 %v699, %v735
    %737 = vdwg.mxu0
    %vm738 = vcmask 58368
    %v739 = vsel %vm738, %v736, -inf
    %740 = vmax.xlane.f32.xlu0 %v739
    %v741 = vpop.xlane.xlu0 %740
    %v742 = vsub.f32 %v736, %v741
    %v743 = vmul.f32 %v742, 1.442695
    %v744 = vpow.pop %v743
    %v745 = vsel %vm738, %v744, 0.0
    %746 = vadd.xlane.f32.xlu0 %v745
    %v747 = vpop.xlane.xlu0 %746
    %v748 = vrcp.pop %v747
    %v749 = vmul.f32 %v747, %v748
    %v750 = vsub.f32 1.0, %v749
    %v751 = vmul.f32 %v748, %v750
    %v752 = vadd.f32 %v748, %v751
    %vm753 = vweird.f32 %v747
    %vm754 = vweird.f32 %v748
    %vm755 = vmor %vm753, %vm754
    %v756 = vsel %vm755, %v748, %v752
    %v757 = vand.u32 2147483647, %v747
    %vm758 = vcmp.eq.f32.partialorder %v757, 8.507059e+37
    %v759 = vand.u32 %v747, 2147483648
    %v760 = vor.u32 1.1754944e-38, %v759
    %v761 = vsel %vm758, %v760, %v756
    %v762 = vmul.f32 %v744, %v761
    %vm763 = vcmask 64512
    %v765 = vsel %vm763, %v762, 0
    %767 = vmatpush.msra.mxu0 0.0
    %768 = vmatpush.msra.mxu0 0.0
    %769 = vmatpush.msra.mxu0 0.0
    %770 = vmatpush.msra.mxu0 0.0
    %771 = vmatpush.msra.mxu0 0.0
    %772 = vmatpush.msra.mxu0 0.0
    %773 = vmatpush.msra.mxu0 0.0
    %774 = vmatpush.msra.mxu0 0.0
    %775 = vmatpush.msra.mxu0 0.0
    %776 = vmatpush.msra.mxu0 0.0
    %777 = vmatpush.msra.mxu0 0.0
    %778 = vmatpush.msra.mxu0 0.0
    %779 = vmatpush.msra.mxu0 0.0
    %780 = vmatpush.msra.mxu0 0.0
    %781 = vmatpush.msra.mxu0 0.0
    %782 = vmatpush.msra.mxu0 %v47
    %783 = vmatmul.f32.gmra.mxu0 %v765
    %v784 = vpop.f32.mrf.mxu0
    %v785 = vadd.f32 0.0, %v784
    %786 = vdwg.mxu0
    %787 = vmatpush.msra.mxu0 0.0
    %788 = vmatpush.msra.mxu0 0.0
    %789 = vmatpush.msra.mxu0 0.0
    %790 = vmatpush.msra.mxu0 0.0
    %791 = vmatpush.msra.mxu0 0.0
    %792 = vmatpush.msra.mxu0 0.0
    %793 = vmatpush.msra.mxu0 0.0
    %794 = vmatpush.msra.mxu0 0.0
    %795 = vmatpush.msra.mxu0 0.0
    %796 = vmatpush.msra.mxu0 0.0
    %797 = vmatpush.msra.mxu0 0.0
    %798 = vmatpush.msra.mxu0 0.0
    %799 = vmatpush.msra.mxu0 0.0
    %800 = vmatpush.msra.mxu0 0.0
    %801 = vmatpush.msra.mxu0 0.0
    %802 = vmatpush.msra.mxu0 %v48
    %803 = vmatmul.f32.gmra.mxu0 %v765
    %v804 = vpop.f32.mrf.mxu0
    %v805 = vadd.f32 0.0, %v804
    %806 = vdwg.mxu0
    %v809 = vrot.slane %v805, 6
    %vm810 = vcmask 1041408
    %v811 = vsel %vm810, %v785, %v809
    %v813 = vmul.f32 %v49, %v811
    %814 = vst [vmem:[#allocation2] sm:$0xf] %v813
    // Predicated region
    $region14: #{tpu_custom_call.1} parent=1 // pred_check
      _
    $region15: #{tpu_custom_call.1} parent=1 // pred_check_branch
      %816 = sbr.rel (0) target = $region17
    $region16: #{tpu_custom_call.1} parent=1 // pred_region
      %818 = vsyncadd [#allocation3], 0
      %s820 = sshll.u32 [#allocation2], 4
      %s821 = int_to_ptr.vmem [resolvable:$true] %s820
      %s822 = sshll.u32 %s3, 4
      %s823 = int_to_ptr.hbm [resolvable:$true] %s822
      %825 = dma.vmem_to_hbm [thread:$0]  %s821, 64, %s823, [#allocation3]
    $region17: #{tpu_custom_call.1} parent=1 // pred_fallthru
      _
    // Predicated region
    $region18: #{tpu_custom_call.1} parent=1 // pred_check
      _
    $region19: #{tpu_custom_call.1} parent=1 // pred_check_branch
      %827 = sbr.rel (0) target = $region21
    $region20: #{tpu_custom_call.1} parent=1 // pred_region
      %829 = dma.done [#allocation3], 64
    $region21: #{tpu_custom_call.1} parent=1 // pred_fallthru
      _
    %830 = vsyncpa [#allocation3], 1

</llo_original>
